<compile_context>
chip_gen: v5e
topology: v5e:2x2
jax: 0.10.0
libtpu: 0.0.40
codegen_flags: <defaults>
</compile_context>

<pallas_src>
import functools

import jax
import jax.numpy as jnp
from jax.experimental import pallas as pl
from jax.experimental.pallas import tpu as pltpu


def _choose_tile(n):
    """Largest 'nice' sequence tile dividing n (mult of 8 sublanes / 128 lanes)."""
    for tn in (512, 256, 128):
        if n % tn == 0:
            return tn
    return n  # small / awkward N: one block covering the whole sequence


def _vmem_limit_bytes(tn, dc, dd, itemsize):
    blk = tn * dc * itemsize
    weights = (dd * dc + dc * dc + dc) * itemsize
    # 2x double-buffered input + 2x double-buffered output + resident weights + slack
    need = 4 * blk + weights + (2 << 20)
    return int(min(max(need, 32 << 20), 64 << 20))


# --------------------------- pass 1: gate kernels ---------------------------

def _gate_kernel_masked(eps, x_ref, cond_ref, mask_ref, wc_ref, wx_ref, b_ref,
                        gate_ref, acc_ref, den_ref):
    n = pl.program_id(1)

    @pl.when(n == 0)
    def _():
        acc_ref[...] = jnp.zeros_like(acc_ref)
        den_ref[...] = jnp.zeros_like(den_ref)

    x2d = x_ref[0]                                    # (tn, Dc), native dtype
    m = mask_ref[0].astype(jnp.float32)               # (1, tn); 1.0 == masked
    w_row = (1.0 - m).astype(x2d.dtype)               # (1, tn) of 0/1
    # Sequence reduction on the MXU: (1, tn) @ (tn, Dc) -> (1, Dc), f32 acc.
    acc_ref[...] += jnp.dot(w_row, x2d, preferred_element_type=jnp.float32)
    den_ref[...] += jnp.sum(m, axis=-1, keepdims=True)

    @pl.when(n == pl.num_programs(1) - 1)
    def _():
        # Faithfully reproduces the PyTorch source: denom = (#masked).clamp(eps)
        denom = jnp.maximum(den_ref[...], eps)                      # (1, 1)
        mean_x = acc_ref[...] / denom                               # (1, Dc) f32
        cond = cond_ref[0].astype(jnp.float32)                      # (1, Dd)
        gate = (
            jnp.dot(cond, wc_ref[...].astype(jnp.float32),
                    preferred_element_type=jnp.float32)
            + jnp.dot(mean_x, wx_ref[...].astype(jnp.float32),
                      preferred_element_type=jnp.float32)
            + b_ref[...].astype(jnp.float32)
        )                                                           # (1, Dc)
        gate_ref[...] = jax.nn.sigmoid(gate)[None].astype(gate_ref.dtype)


def _gate_kernel_unmasked(inv_n, x_ref, cond_ref, wc_ref, wx_ref, b_ref,
                          gate_ref, acc_ref):
    n = pl.program_id(1)

    @pl.when(n == 0)
    def _():
        acc_ref[...] = jnp.zeros_like(acc_ref)

    x2d = x_ref[0]                                    # (tn, Dc), native dtype
    ones_row = jnp.ones((1, x2d.shape[0]), dtype=x2d.dtype)
    acc_ref[...] += jnp.dot(ones_row, x2d, preferred_element_type=jnp.float32)

    @pl.when(n == pl.num_programs(1) - 1)
    def _():
        mean_x = acc_ref[...] * inv_n                               # (1, Dc) f32
        cond = cond_ref[0].astype(jnp.float32)                      # (1, Dd)
        gate = (
            jnp.dot(cond, wc_ref[...].astype(jnp.float32),
                    preferred_element_type=jnp.float32)
            + jnp.dot(mean_x, wx_ref[...].astype(jnp.float32),
                      preferred_element_type=jnp.float32)
            + b_ref[...].astype(jnp.float32)
        )
        gate_ref[...] = jax.nn.sigmoid(gate)[None].astype(gate_ref.dtype)


# --------------------------- pass 2: scale kernel ---------------------------

def _scale_kernel(x_ref, gate_ref, o_ref):
    # (1, tn, Dc) * (1, 1, Dc) broadcast, in x's native dtype (no upcast).
    o_ref[...] = (x_ref[...] * gate_ref[...]).astype(o_ref.dtype)


# -------------------------------- wrapper -----------------------------------

def squeeze_excitation(x, condition, w_cond, w_x, bias, mask=None, eps=1e-8):
    """Pallas implementation of SqueezeExcitation.forward.

    x:         (B, N, Dc)
    condition: (B, Dd)
    w_cond:    (Dd, Dc)  rows of the Linear weight hitting `condition`
    w_x:       (Dc, Dc)  rows of the Linear weight hitting mean(x)
    bias:      (Dc,)
    mask:      optional (B, N) bool (True == masked, as in masked_fill)
    """
    B, N, Dc = x.shape
    Dd = condition.shape[-1]
    tn = _choose_tile(N)
    nt = N // tn
    itemsize = jnp.dtype(x.dtype).itemsize
    vmem_limit = _vmem_limit_bytes(tn, Dc, Dd, max(itemsize, 4))

    cond3 = condition.reshape(B, 1, Dd)
    bias2 = bias.reshape(1, Dc)

    # ---- pass 1: per-batch gate = sigmoid([cond, mean(x)] @ W + b) ----
    gate_inputs = [x, cond3]
    gate_in_specs = [
        pl.BlockSpec((1, tn, Dc), lambda b, n: (b, n, 0)),
        pl.BlockSpec((1, 1, Dd), lambda b, n: (b, 0, 0)),
    ]
    scratch = [pltpu.VMEM((1, Dc), jnp.float32)]
    if mask is not None:
        mask_row = mask.reshape(B, 1, N).astype(jnp.int8)   # lane-dense mask
        gate_inputs.append(mask_row)
        gate_in_specs.append(pl.BlockSpec((1, 1, tn), lambda b, n: (b, 0, n)))
        scratch.append(pltpu.VMEM((1, 1), jnp.float32))
        kernel = functools.partial(_gate_kernel_masked, float(eps))
    else:
        kernel = functools.partial(_gate_kernel_unmasked, 1.0 / float(N))

    gate_inputs += [w_cond, w_x, bias2]
    gate_in_specs += [
        pl.BlockSpec((Dd, Dc), lambda b, n: (0, 0)),
        pl.BlockSpec((Dc, Dc), lambda b, n: (0, 0)),
        pl.BlockSpec((1, Dc), lambda b, n: (0, 0)),
    ]

    gates = pl.pallas_call(
        kernel,
        out_shape=jax.ShapeDtypeStruct((B, 1, Dc), x.dtype),
        grid=(B, nt),
        in_specs=gate_in_specs,
        out_specs=pl.BlockSpec((1, 1, Dc), lambda b, n: (b, 0, 0)),
        scratch_shapes=scratch,
        compiler_params=pltpu.CompilerParams(
            dimension_semantics=("parallel", "arbitrary"),
            vmem_limit_bytes=vmem_limit),
    )(*gate_inputs)

    # ---- pass 2: y = x * gate (broadcast over the sequence axis) ----
    out = pl.pallas_call(
        _scale_kernel,
        out_shape=jax.ShapeDtypeStruct((B, N, Dc), x.dtype),
        grid=(B, nt),
        in_specs=[
            pl.BlockSpec((1, tn, Dc), lambda b, n: (b, n, 0)),
            pl.BlockSpec((1, 1, Dc), lambda b, n: (b, 0, 0)),
        ],
        out_specs=pl.BlockSpec((1, tn, Dc), lambda b, n: (b, n, 0)),
        compiler_params=pltpu.CompilerParams(
            dimension_semantics=("parallel", "parallel"),
            vmem_limit_bytes=vmem_limit),
    )(x, gates)
    return out


def reference(x, condition, w_cond, w_x, bias, mask=None, eps=1e-8):
    """Plain-JAX mirror of the PyTorch forward (including the mask quirk)."""
    if mask is not None:
        numer = jnp.where(mask[..., None], 0.0, x).sum(axis=1)
        denom = jnp.maximum(mask.sum(axis=1)[..., None].astype(x.dtype), eps)
        mean_x = numer / denom
    else:
        mean_x = x.mean(axis=1)
    cat = jnp.concatenate([condition, mean_x], axis=-1)
    W = jnp.concatenate([w_cond, w_x], axis=0)            # (Dd+Dc, Dc)
    gate = cat @ W + bias
    return x * jax.nn.sigmoid(gate)[:, None, :]


if __name__ == "__main__":
    # SqueezeExcitation(dim=16, conditioned_dim=32):
    #   x: (B, N, conditioned_dim), condition: (B, dim)
    B, N = 2, 8
    DIM, COND_DIM = 16, 32

    key = jax.random.PRNGKey(0)
    kx, kc, kw, kb, km = jax.random.split(key, 5)

    x = jax.random.normal(kx, (B, N, COND_DIM), dtype=jnp.float32)
    condition = jax.random.normal(kc, (B, DIM), dtype=jnp.float32)

    # Deterministic Linear(dim + conditioned_dim, conditioned_dim) params,
    # uniform(-1/sqrt(fan_in), 1/sqrt(fan_in)) like torch's default init.
    fan_in = DIM + COND_DIM
    bound = 1.0 / (fan_in ** 0.5)
    W_full = jax.random.uniform(kw, (fan_in, COND_DIM), jnp.float32, -bound, bound)
    bias = jax.random.uniform(kb, (COND_DIM,), jnp.float32, -bound, bound)
    w_cond, w_x = W_full[:DIM], W_full[DIM:]

    # --- no-mask path ---
    out = squeeze_excitation(x, condition, w_cond, w_x, bias)
    out = jax.block_until_ready(out)
    ref = reference(x, condition, w_cond, w_x, bias)
    assert out.shape == (B, N, COND_DIM)
    assert jnp.allclose(out, ref, atol=1e-5, rtol=1e-5)

    # --- masked path (True == masked position, reproducing torch code exactly) ---
    mask = jax.random.bernoulli(km, 0.5, (B, N))
    out_m = squeeze_excitation(x, condition, w_cond, w_x, bias, mask=mask)
    out_m = jax.block_until_ready(out_m)
    ref_m = reference(x, condition, w_cond, w_x, bias, mask=mask)
    assert jnp.allclose(out_m, ref_m, atol=1e-5, rtol=1e-5)

    print("KERNEL_OK")
</pallas_src>

<mosaic_0001>
module attributes {stable_mosaic.version = 11 : i64} {
  func.func @_gate_kernel_unmasked(%arg0: i32, %arg1: i32, %arg2: memref<1x8x32xf32, #tpu.memory_space<vmem>>, %arg3: memref<1x1x16xf32, #tpu.memory_space<vmem>>, %arg4: memref<16x32xf32, #tpu.memory_space<vmem>>, %arg5: memref<32x32xf32, #tpu.memory_space<vmem>>, %arg6: memref<1x32xf32, #tpu.memory_space<vmem>>, %arg7: memref<1x1x32xf32, #tpu.memory_space<vmem>>, %arg8: memref<1x32xf32, #tpu.memory_space<vmem>>) attributes {dimension_semantics = [#tpu.dimension_semantics<parallel>, #tpu.dimension_semantics<arbitrary>], iteration_bounds = array<i64: 2, 1>, scalar_prefetch = 0 : i64, scratch_operands = 1 : i64, tpu.core_type = #tpu.core_type<tc>, window_params = [{transform_indices = @transform_0, window_bounds = array<i64: 1, 8, 32>}, {transform_indices = @transform_1, window_bounds = array<i64: 1, 1, 16>}, {pipeline_mode = #tpu.pipeline_mode<synchronous>, transform_indices = @transform_2, window_bounds = array<i64: 16, 32>}, {pipeline_mode = #tpu.pipeline_mode<synchronous>, transform_indices = @transform_3, window_bounds = array<i64: 32, 32>}, {pipeline_mode = #tpu.pipeline_mode<synchronous>, transform_indices = @transform_4, window_bounds = array<i64: 1, 32>}, {transform_indices = @transform_5, window_bounds = array<i64: 1, 1, 32>}]} {
    %c0_i32 = arith.constant 0 : i32
    %0 = arith.cmpi eq, %arg1, %c0_i32 : i32
    %1 = arith.extui %0 : i1 to i32
    %c0_i32_0 = arith.constant 0 : i32
    %2 = arith.cmpi ne, %1, %c0_i32_0 : i32
    scf.if %2 {
      %cst_10 = arith.constant 0.000000e+00 : f32
      %13 = vector.broadcast %cst_10 : f32 to vector<1x32xf32>
      %c0_11 = arith.constant 0 : index
      %c0_12 = arith.constant 0 : index
      %14 = vector.load %arg8[%c0_11, %c0_12] : memref<1x32xf32, #tpu.memory_space<vmem>>, vector<1x32xf32>
      tpu.vector_store %arg8[%c0_11, %c0_12], %13 {strides = array<i32>} : memref<1x32xf32, #tpu.memory_space<vmem>>, vector<1x32xf32>,
    } else {
    }
    %c0 = arith.constant 0 : index
    %c0_1 = arith.constant 0 : index
    %c0_2 = arith.constant 0 : index
    %3 = vector.load %arg2[%c0, %c0_1, %c0_2] : memref<1x8x32xf32, #tpu.memory_space<vmem>>, vector<1x8x32xf32>
    %4 = vector.shape_cast %3 : vector<1x8x32xf32> to vector<8x32xf32>
    %cst = arith.constant 1.000000e+00 : f32
    %5 = vector.broadcast %cst : f32 to vector<1x8xf32>
    %c0_3 = arith.constant 0 : index
    %c0_4 = arith.constant 0 : index
    %6 = vector.load %arg8[%c0_3, %c0_4] : memref<1x32xf32, #tpu.memory_space<vmem>>, vector<1x32xf32>
    %cst_5 = arith.constant dense<0.000000e+00> : vector<1x32xf32>
    %7 = tpu.matmul %5, %4, %cst_5 {dimension_numbers = #tpu.dot_dimension_numbers<[1], [0], [0], [1], [0, 0, 1, 1], [], []>} : vector<1x8xf32>, vector<8x32xf32>, vector<1x32xf32> -> vector<1x32xf32>
    %8 = arith.addf %6, %7 : vector<1x32xf32>
    %c0_6 = arith.constant 0 : index
    %c0_7 = arith.constant 0 : index
    %9 = vector.load %arg8[%c0_6, %c0_7] : memref<1x32xf32, #tpu.memory_space<vmem>>, vector<1x32xf32>
    tpu.vector_store %arg8[%c0_6, %c0_7], %8 {strides = array<i32>} : memref<1x32xf32, #tpu.memory_space<vmem>>, vector<1x32xf32>,
    %c0_i32_8 = arith.constant 0 : i32
    %10 = arith.cmpi eq, %arg1, %c0_i32_8 : i32
    %11 = arith.extui %10 : i1 to i32
    %c0_i32_9 = arith.constant 0 : i32
    %12 = arith.cmpi ne, %11, %c0_i32_9 : i32
    scf.if %12 {
      %c0_10 = arith.constant 0 : index
      %c0_11 = arith.constant 0 : index
      %13 = vector.load %arg8[%c0_10, %c0_11] : memref<1x32xf32, #tpu.memory_space<vmem>>, vector<1x32xf32>
      %cst_12 = arith.constant 1.250000e-01 : f32
      %14 = vector.broadcast %cst_12 : f32 to vector<1x32xf32>
      %15 = arith.mulf %13, %14 : vector<1x32xf32>
      %c0_13 = arith.constant 0 : index
      %c0_14 = arith.constant 0 : index
      %c0_15 = arith.constant 0 : index
      %16 = vector.load %arg3[%c0_13, %c0_14, %c0_15] : memref<1x1x16xf32, #tpu.memory_space<vmem>>, vector<1x1x16xf32>
      %17 = vector.shape_cast %16 : vector<1x1x16xf32> to vector<1x16xf32>
      %c0_16 = arith.constant 0 : index
      %c0_17 = arith.constant 0 : index
      %18 = vector.load %arg4[%c0_16, %c0_17] : memref<16x32xf32, #tpu.memory_space<vmem>>, vector<16x32xf32>
      %cst_18 = arith.constant dense<0.000000e+00> : vector<1x32xf32>
      %19 = tpu.matmul %17, %18, %cst_18 {dimension_numbers = #tpu.dot_dimension_numbers<[1], [0], [0], [1], [0, 0, 1, 1], [], []>} : vector<1x16xf32>, vector<16x32xf32>, vector<1x32xf32> -> vector<1x32xf32>
      %c0_19 = arith.constant 0 : index
      %c0_20 = arith.constant 0 : index
      %20 = vector.load %arg5[%c0_19, %c0_20] : memref<32x32xf32, #tpu.memory_space<vmem>>, vector<32x32xf32>
      %cst_21 = arith.constant dense<0.000000e+00> : vector<1x32xf32>
      %21 = tpu.matmul %15, %20, %cst_21 {dimension_numbers = #tpu.dot_dimension_numbers<[1], [0], [0], [1], [0, 0, 1, 1], [], []>} : vector<1x32xf32>, vector<32x32xf32>, vector<1x32xf32> -> vector<1x32xf32>
      %22 = arith.addf %19, %21 : vector<1x32xf32>
      %c0_22 = arith.constant 0 : index
      %c0_23 = arith.constant 0 : index
      %23 = vector.load %arg6[%c0_22, %c0_23] : memref<1x32xf32, #tpu.memory_space<vmem>>, vector<1x32xf32>
      %24 = arith.addf %22, %23 : vector<1x32xf32>
      %25 = arith.negf %24 : vector<1x32xf32>
      %26 = math.exp %25 : vector<1x32xf32>
      %cst_24 = arith.constant 1.000000e+00 : f32
      %27 = vector.broadcast %cst_24 : f32 to vector<1x32xf32>
      %28 = arith.addf %27, %26 : vector<1x32xf32>
      %29 = arith.divf %27, %28 : vector<1x32xf32>
      %30 = vector.shape_cast %29 : vector<1x32xf32> to vector<1x1x32xf32>
      %c0_25 = arith.constant 0 : index
      %c0_26 = arith.constant 0 : index
      %c0_27 = arith.constant 0 : index
      %31 = vector.load %arg7[%c0_25, %c0_26, %c0_27] : memref<1x1x32xf32, #tpu.memory_space<vmem>>, vector<1x1x32xf32>
      tpu.vector_store %arg7[%c0_25, %c0_26, %c0_27], %30 {strides = array<i32>} : memref<1x1x32xf32, #tpu.memory_space<vmem>>, vector<1x1x32xf32>,
    } else {
    }
    return
  }
  func.func @transform_0(%arg0: i32, %arg1: i32) -> (i32, i32, i32) {
    %c0_i32 = arith.constant 0 : i32
    %c0_i32_0 = arith.constant 0 : i32
    return %arg0, %arg1, %c0_i32 : i32, i32, i32
  }
  func.func @transform_1(%arg0: i32, %arg1: i32) -> (i32, i32, i32) {
    %c0_i32 = arith.constant 0 : i32
    %c0_i32_0 = arith.constant 0 : i32
    %c0_i32_1 = arith.constant 0 : i32
    return %arg0, %c0_i32, %c0_i32_0 : i32, i32, i32
  }
  func.func @transform_2(%arg0: i32, %arg1: i32) -> (i32, i32) {
    %c0_i32 = arith.constant 0 : i32
    %c0_i32_0 = arith.constant 0 : i32
    %c0_i32_1 = arith.constant 0 : i32
    return %c0_i32, %c0_i32_0 : i32, i32
  }
  func.func @transform_3(%arg0: i32, %arg1: i32) -> (i32, i32) {
    %c0_i32 = arith.constant 0 : i32
    %c0_i32_0 = arith.constant 0 : i32
    %c0_i32_1 = arith.constant 0 : i32
    return %c0_i32, %c0_i32_0 : i32, i32
  }
  func.func @transform_4(%arg0: i32, %arg1: i32) -> (i32, i32) {
    %c0_i32 = arith.constant 0 : i32
    %c0_i32_0 = arith.constant 0 : i32
    %c0_i32_1 = arith.constant 0 : i32
    return %c0_i32, %c0_i32_0 : i32, i32
  }
  func.func @transform_5(%arg0: i32, %arg1: i32) -> (i32, i32, i32) {
    %c0_i32 = arith.constant 0 : i32
    %c0_i32_0 = arith.constant 0 : i32
    %c0_i32_1 = arith.constant 0 : i32
    return %arg0, %c0_i32, %c0_i32_0 : i32, i32, i32
  }
}

</mosaic_0001>

<llo_original>
// kernel: tpu_custom_call.1
$region0: #{tpu_custom_call.1}
  #allocation0 [shape = 'u32[]', space=smem, size = 0x4, offset = 0x4, fixed_abs, tag = 'smem constant byte address 0x4 - core index']
  #allocation1 [shape = 'u32[72,128]{1,0:T(1,128)}', space=vmem, size = 0x9000, scoped, tag = 'internal scratch']
  #allocation2 [shape = 'f32[1,32]{1,0:T(1,128)}', space=vmem, size = 0x200, scoped, tag = 'scratch operand']
  %s0 = inlined_call_operand.hbm [shape: f32[2,8,32], index: 0, kind: input, shape index: {}]
  %s1 = inlined_call_operand.hbm [shape: f32[2,1,16], index: 1, kind: input, shape index: {}]
  %s2 = inlined_call_operand.hbm [shape: f32[16,32], index: 2, kind: input, shape index: {}]
  %s3 = inlined_call_operand.hbm [shape: f32[32,32], index: 3, kind: input, shape index: {}]
  %s4 = inlined_call_operand.vmem [shape: f32[1,32], index: 4, kind: input, shape index: {}]
  %s5 = inlined_call_operand.hbm [shape: f32[2,1,32], index: 5, kind: output, shape index: {}]
  %s6 = sld [smem:[#allocation0]]
  $region77: #{tpu_custom_call.1} parent=0
    _
  %s8 = ssub.s32 1, %s6
  %s9 = scalar_select 0, %s8, %s6
  $region1: #{tpu_custom_call.1} parent=0
    #allocation3 [shape = 'u8[8192]{0}', space=vmem, size = 0x2000, scoped, tag = 'input window, operand 0']
    #allocation4 [shape = 's32[2]{0}', space=sflag, size = 0x8, scoped, tag = 'scoped memory for tpu_custom_call.1']
    #allocation5 [shape = 's32[2]{0}', space=sflag, size = 0x8, scoped, tag = 'scoped memory for tpu_custom_call.1']
    #allocation6 [shape = 'u8[1024]{0}', space=vmem, size = 0x400, scoped, tag = 'input window, operand 1']
    #allocation7 [shape = 's32[2]{0}', space=sflag, size = 0x8, scoped, tag = 'scoped memory for tpu_custom_call.1']
    #allocation8 [shape = 'u8[8192]{0}', space=vmem, size = 0x2000, scoped, tag = 'input window, operand 2, single buffered']
    #allocation9 [shape = 'u8[16384]{0}', space=vmem, size = 0x4000, scoped, tag = 'input window, operand 3, single buffered']
    #allocation10 [shape = 's32[1]{0}', space=sflag, size = 0x4, scoped, tag = 'scoped memory for tpu_custom_call.1']
    #allocation11 [shape = 'u8[1024]{0}', space=vmem, size = 0x400, scoped, tag = 'output window, operand 0']
    %10 = vsyncpa [#allocation4], 0
    %s11 = scalar_lea.sflag [#allocation4], 1
    %12 = vsyncpa %s11, 0
    %13 = vsyncpa [#allocation7], 0
    %s14 = scalar_lea.sflag [#allocation7], 1
    %15 = vsyncpa %s14, 0
    %16 = vsyncpa [#allocation10], 0
    %17 = vsyncpa [#allocation5], 0
    %s18 = scalar_lea.sflag [#allocation5], 1
    %19 = vsyncpa %s18, 0
    loop: start=0, step=1, limit=4
    $region2: #{tpu_custom_call.1} parent=1 // loop_pre_header
      _
    $region3: #{tpu_custom_call.1} parent=1 // loop_header
      %s21 = sphi 0, %s25
      %p22 = scmp.ge.s32.totalorder %s21, 4
      %s28 = sphi 0, %s40
      %s29 = sphi 0, %s36
      %s30 = sphi 0, %s28
      %s31 = sphi 0, %s29
      %s32 = sphi 0, %s30
      %s33 = sphi 0, %s31
      %s45 = sphi 0, %s47
      %s48 = sphi 0, %s45
      %s49 = sphi 0, %s48
      %s65 = sphi 0, %s49
      %s71 = sphi 0, %s73
      %s74 = sphi 0, %s71
      %s75 = sphi 0, %s74
      %s91 = sphi 0, %s75
      %s95 = sphi 0, %s95
      %s97 = sphi 0, %s95
      %s98 = sphi 0, %s97
      %s112 = sphi 0, %s98
      %s116 = sphi 0, %s116
      %s118 = sphi 0, %s116
      %s119 = sphi 0, %s118
      %s133 = sphi 0, %s119
      %s137 = sphi 0, %s137
      %s139 = sphi 0, %s137
      %s140 = sphi 0, %s139
      %s154 = sphi 0, %s140
      %s160 = sphi 0, %s162
      %s163 = sphi 0, %s160
      %s164 = sphi 0, %s163
      %s180 = sphi 0, %s164
    $region4: #{tpu_custom_call.1} parent=1 // loop_header_branch
      %24 = sbr.rel (%p22) target = $region8
    $region5: #{tpu_custom_call.1} parent=1 // loop_body
      %s26 = ssub.s32 %s21, 1
      %s27 = ssub.s32 %s21, 2
      %s34 = sadd.s32 1, %s29
      %p35 = scmp.ge.s32.totalorder %s34, 1
      %s36 = scalar_select %p35, 0, %s34
      %s37 = sadd.s32 1, %s28
      %s38 = scalar_select %p35, %s37, %s28
      %p39 = scmp.ge.s32.totalorder %s38, 2
      %s40 = scalar_select %p39, 0, %s38
      %s41 = ssub.s32 %s28, %s40
      %s42 = ssub.s32 %s29, %s36
      %s43 = sor.u32 %s41, %s42
      %p44 = scmp.eq.s32.totalorder %s43, 0
      %s46 = sadd.s32 %s45, 1
      %s47 = scalar_select %p44, %s45, %s46
      %p50 = pneg %p44
      %p51 = scmp.eq.s32.totalorder %s21, 1
      %p52 = por %p50, %p51
      %p53 = scmp.ne.s32.totalorder %s45, %s48
      %p54 = scmp.eq.s32.totalorder %s21, 0
      %p55 = por %p53, %p54
      %p56 = scmp.ne.s32.totalorder %s45, %s48
      %p57 = scmp.eq.s32.totalorder %s26, 1
      %p58 = por %p56, %p57
      %p59 = scmp.ne.s32.totalorder %s48, %s49
      %p60 = scmp.eq.s32.totalorder %s26, 0
      %p61 = por %p59, %p60
      %p62 = scmp.ne.s32.totalorder %s48, %s49
      %p63 = scmp.eq.s32.totalorder %s27, 1
      %p64 = por %p62, %p63
      %p66 = scmp.ne.s32.totalorder %s49, %s65
      %p67 = scmp.eq.s32.totalorder %s27, 0
      %p68 = por %p66, %p67
      %s69 = ssub.s32 %s28, %s40
      %p70 = scmp.eq.s32.totalorder %s69, 0
      %s72 = sadd.s32 %s71, 1
      %s73 = scalar_select %p70, %s71, %s72
      %p76 = pneg %p70
      %p77 = scmp.eq.s32.totalorder %s21, 1
      %p78 = por %p76, %p77
      %p79 = scmp.ne.s32.totalorder %s71, %s74
      %p80 = scmp.eq.s32.totalorder %s21, 0
      %p81 = por %p79, %p80
      %p82 = scmp.ne.s32.totalorder %s71, %s74
      %p83 = scmp.eq.s32.totalorder %s26, 1
      %p84 = por %p82, %p83
      %p85 = scmp.ne.s32.totalorder %s74, %s75
      %p86 = scmp.eq.s32.totalorder %s26, 0
      %p87 = por %p85, %p86
      %p88 = scmp.ne.s32.totalorder %s74, %s75
      %p89 = scmp.eq.s32.totalorder %s27, 1
      %p90 = por %p88, %p89
      %p92 = scmp.ne.s32.totalorder %s75, %s91
      %p93 = scmp.eq.s32.totalorder %s27, 0
      %p94 = por %p92, %p93
      %s96 = sadd.s32 %s95, 1
      %p99 = scmp.eq.s32.totalorder %s21, 1
      %p100 = scmp.ne.s32.totalorder %s95, %s97
      %p101 = scmp.eq.s32.totalorder %s21, 0
      %p102 = por %p100, %p101
      %p103 = scmp.ne.s32.totalorder %s95, %s97
      %p104 = scmp.eq.s32.totalorder %s26, 1
      %p105 = por %p103, %p104
      %p106 = scmp.ne.s32.totalorder %s97, %s98
      %p107 = scmp.eq.s32.totalorder %s26, 0
      %p108 = por %p106, %p107
      %p109 = scmp.ne.s32.totalorder %s97, %s98
      %p110 = scmp.eq.s32.totalorder %s27, 1
      %p111 = por %p109, %p110
      %p113 = scmp.ne.s32.totalorder %s98, %s112
      %p114 = scmp.eq.s32.totalorder %s27, 0
      %p115 = por %p113, %p114
      %s117 = sadd.s32 %s116, 1
      %p120 = scmp.eq.s32.totalorder %s21, 1
      %p121 = scmp.ne.s32.totalorder %s116, %s118
      %p122 = scmp.eq.s32.totalorder %s21, 0
      %p123 = por %p121, %p122
      %p124 = scmp.ne.s32.totalorder %s116, %s118
      %p125 = scmp.eq.s32.totalorder %s26, 1
      %p126 = por %p124, %p125
      %p127 = scmp.ne.s32.totalorder %s118, %s119
      %p128 = scmp.eq.s32.totalorder %s26, 0
      %p129 = por %p127, %p128
      %p130 = scmp.ne.s32.totalorder %s118, %s119
      %p131 = scmp.eq.s32.totalorder %s27, 1
      %p132 = por %p130, %p131
      %p134 = scmp.ne.s32.totalorder %s119, %s133
      %p135 = scmp.eq.s32.totalorder %s27, 0
      %p136 = por %p134, %p135
      %s138 = sadd.s32 %s137, 1
      %p141 = scmp.eq.s32.totalorder %s21, 1
      %p142 = scmp.ne.s32.totalorder %s137, %s139
      %p143 = scmp.eq.s32.totalorder %s21, 0
      %p144 = por %p142, %p143
      %p145 = scmp.ne.s32.totalorder %s137, %s139
      %p146 = scmp.eq.s32.totalorder %s26, 1
      %p147 = por %p145, %p146
      %p148 = scmp.ne.s32.totalorder %s139, %s140
      %p149 = scmp.eq.s32.totalorder %s26, 0
      %p150 = por %p148, %p149
      %p151 = scmp.ne.s32.totalorder %s139, %s140
      %p152 = scmp.eq.s32.totalorder %s27, 1
      %p153 = por %p151, %p152
      %p155 = scmp.ne.s32.totalorder %s140, %s154
      %p156 = scmp.eq.s32.totalorder %s27, 0
      %p157 = por %p155, %p156
      %s158 = ssub.s32 %s28, %s40
      %p159 = scmp.eq.s32.totalorder %s158, 0
      %s161 = sadd.s32 %s160, 1
      %s162 = scalar_select %p159, %s160, %s161
      %p165 = pneg %p159
      %p166 = scmp.eq.s32.totalorder %s21, 1
      %p167 = por %p165, %p166
      %p168 = scmp.ne.s32.totalorder %s160, %s163
      %p169 = scmp.eq.s32.totalorder %s21, 0
      %p170 = por %p168, %p169
      %p171 = scmp.ne.s32.totalorder %s160, %s163
      %p172 = scmp.eq.s32.totalorder %s26, 1
      %p173 = por %p171, %p172
      %p174 = scmp.ne.s32.totalorder %s163, %s164
      %p175 = scmp.eq.s32.totalorder %s26, 0
      %p176 = por %p174, %p175
      %p177 = scmp.ne.s32.totalorder %s163, %s164
      %p178 = scmp.eq.s32.totalorder %s27, 1
      %p179 = por %p177, %p178
      %p181 = scmp.ne.s32.totalorder %s164, %s180
      %p182 = scmp.eq.s32.totalorder %s27, 0
      %p183 = por %p181, %p182
      %p184 = scmp.le.s32.totalorder 1, %s21
      %p185 = scmp.lt.s32.totalorder %s21, 3
      %p186 = pnand %p184, %p185
      %p187 = pneg %p186
      // Predicated region
      $region9: #{tpu_custom_call.1} parent=5 // pred_check
        _
      $region10: #{tpu_custom_call.1} parent=5 // pred_check_branch
        %189 = sbr.rel (%p186) target = $region12
      $region11: #{tpu_custom_call.1} parent=5 // pred_region
        %s190 = ssub.s32 %s21, 1
        // Predicated region
        $region13: #{tpu_custom_call.1} parent=11 // pred_check
          %p191 = pneg %p108
        $region14: #{tpu_custom_call.1} parent=11 // pred_check_branch
          %193 = sbr.rel (%p191) target = $region16
        $region15: #{tpu_custom_call.1} parent=11 // pred_region
          %195 = vsyncadd [#allocation7], 0
          %s196 = sshll.u32 %s2, 4
          %s197 = int_to_ptr.hbm [resolvable:$true] %s196
          %s198 = sshll.u32 [#allocation8], 4
          %s199 = int_to_ptr.vmem [resolvable:$true] %s198
          %204 = dma.hbm_to_vmem [thread:$0]  %s197, 256, %s199, [#allocation7], 128, 128, 8
        $region16: #{tpu_custom_call.1} parent=11 // pred_fallthru
          _
        // Predicated region
        $region17: #{tpu_custom_call.1} parent=11 // pred_check
          %p205 = pneg %p129
        $region18: #{tpu_custom_call.1} parent=11 // pred_check_branch
          %207 = sbr.rel (%p205) target = $region20
        $region19: #{tpu_custom_call.1} parent=11 // pred_region
          %209 = vsyncadd [#allocation10], 0
          %s210 = sshll.u32 %s3, 4
          %s211 = int_to_ptr.hbm [resolvable:$true] %s210
          %s212 = sshll.u32 [#allocation9], 4
          %s213 = int_to_ptr.vmem [resolvable:$true] %s212
          %218 = dma.hbm_to_vmem [thread:$0]  %s211, 512, %s213, [#allocation10], 128, 128, 8
        $region20: #{tpu_custom_call.1} parent=11 // pred_fallthru
          _
        // Predicated region
        $region21: #{tpu_custom_call.1} parent=11 // pred_check
          %p219 = pneg %p150
        $region22: #{tpu_custom_call.1} parent=11 // pred_check_branch
          %221 = sbr.rel (%p219) target = $region24
        $region23: #{tpu_custom_call.1} parent=11 // pred_region
          _
        $region24: #{tpu_custom_call.1} parent=11 // pred_fallthru
          _
      $region12: #{tpu_custom_call.1} parent=5 // pred_fallthru
        _
      %p222 = scmp.lt.s32.totalorder %s21, 2
      // Predicated region
      $region25: #{tpu_custom_call.1} parent=5 // pred_check
        %p223 = pneg %p222
      $region26: #{tpu_custom_call.1} parent=5 // pred_check_branch
        %225 = sbr.rel (%p223) target = $region28
      $region27: #{tpu_custom_call.1} parent=5 // pred_region
        // Predicated region
        $region29: #{tpu_custom_call.1} parent=27 // pred_check
          %p226 = pneg %p55
        $region30: #{tpu_custom_call.1} parent=27 // pred_check_branch
          %228 = sbr.rel (%p226) target = $region32
        $region31: #{tpu_custom_call.1} parent=27 // pred_region
          %s229 = sand.u32 %s45, 1
          %s230 = scalar_lea.sflag [#allocation4], %s229
          %s231 = sand.u32 %s45, 1
          %s232 = smul.addr %s231, 8
          %s233 = scalar_lea.vmem [#allocation3], %s232
          %235 = vsyncadd %s230, 0
          %s236 = sadd.s32 %s29, %s28
          %s237 = smul.addr %s236, 8
          %s238 = scalar_lea.hbm %s0, %s237
          %s240 = sshll.u32 %s238, 4
          %s241 = int_to_ptr.hbm [resolvable:$true] %s240
          %s242 = sshll.u32 %s233, 4
          %s243 = int_to_ptr.vmem [resolvable:$true] %s242
          %245 = dma.hbm_to_vmem [thread:$0]  %s241, 128, %s243, %s230
        $region32: #{tpu_custom_call.1} parent=27 // pred_fallthru
          _
        // Predicated region
        $region33: #{tpu_custom_call.1} parent=27 // pred_check
          %p246 = pneg %p81
        $region34: #{tpu_custom_call.1} parent=27 // pred_check_branch
          %248 = sbr.rel (%p246) target = $region36
        $region35: #{tpu_custom_call.1} parent=27 // pred_region
          %s249 = sand.u32 %s21, 1
          %s250 = scalar_lea.sflag [#allocation7], %s249
          %s251 = sand.u32 %s71, 1
          %s252 = scalar_lea.vmem [#allocation6], %s251
          %254 = vsyncadd %s250, 0
          %s255 = scalar_lea.hbm %s1, %s28
          %s257 = sshll.u32 %s255, 4
          %s258 = int_to_ptr.hbm [resolvable:$true] %s257
          %s259 = sshll.u32 %s252, 4
          %s260 = int_to_ptr.vmem [resolvable:$true] %s259
          %262 = dma.hbm_to_vmem [thread:$0]  %s258, 16, %s260, %s250
        $region36: #{tpu_custom_call.1} parent=27 // pred_fallthru
          _
      $region28: #{tpu_custom_call.1} parent=5 // pred_fallthru
        _
      %p263 = scmp.le.s32.totalorder 1, %s21
      %p264 = scmp.lt.s32.totalorder %s21, 3
      %p265 = pnand %p263, %p264
      %p266 = pneg %p265
      // Predicated region
      $region37: #{tpu_custom_call.1} parent=5 // pred_check
        _
      $region38: #{tpu_custom_call.1} parent=5 // pred_check_branch
        %268 = sbr.rel (%p265) target = $region40
      $region39: #{tpu_custom_call.1} parent=5 // pred_region
        %s269 = ssub.s32 %s21, 1
        %s270 = sand.u32 %s48, 1
        %s271 = scalar_lea.sflag [#allocation4], %s270
        %s272 = sand.u32 %s48, 1
        %s273 = smul.addr %s272, 8
        %s274 = scalar_lea.vmem [#allocation3], %s273
        // Predicated region
        $region41: #{tpu_custom_call.1} parent=39 // pred_check
          %p275 = pneg %p61
        $region42: #{tpu_custom_call.1} parent=39 // pred_check_branch
          %277 = sbr.rel (%p275) target = $region44
        $region43: #{tpu_custom_call.1} parent=39 // pred_region
          %279 = dma.done %s271, 128
        $region44: #{tpu_custom_call.1} parent=39 // pred_fallthru
          _
        %s280 = sand.u32 %s26, 1
        %s281 = scalar_lea.sflag [#allocation7], %s280
        %s282 = sand.u32 %s74, 1
        %s283 = scalar_lea.vmem [#allocation6], %s282
        // Predicated region
        $region45: #{tpu_custom_call.1} parent=39 // pred_check
          %p284 = pneg %p87
        $region46: #{tpu_custom_call.1} parent=39 // pred_check_branch
          %286 = sbr.rel (%p284) target = $region48
        $region47: #{tpu_custom_call.1} parent=39 // pred_region
          %288 = dma.done %s281, 16
        $region48: #{tpu_custom_call.1} parent=39 // pred_fallthru
          _
        // Predicated region
        $region49: #{tpu_custom_call.1} parent=39 // pred_check
          %p289 = pneg %p108
        $region50: #{tpu_custom_call.1} parent=39 // pred_check_branch
          %291 = sbr.rel (%p289) target = $region52
        $region51: #{tpu_custom_call.1} parent=39 // pred_region
          %293 = dma.done [#allocation7], 256
        $region52: #{tpu_custom_call.1} parent=39 // pred_fallthru
          _
        // Predicated region
        $region53: #{tpu_custom_call.1} parent=39 // pred_check
          %p294 = pneg %p129
        $region54: #{tpu_custom_call.1} parent=39 // pred_check_branch
          %296 = sbr.rel (%p294) target = $region56
        $region55: #{tpu_custom_call.1} parent=39 // pred_region
          %298 = dma.done [#allocation10], 512
        $region56: #{tpu_custom_call.1} parent=39 // pred_fallthru
          _
        %s299 = sand.u32 %s48, 1
        %s300 = scalar_lea.sflag [#allocation4], %s299
        %s301 = sand.u32 %s48, 1
        %s302 = smul.addr %s301, 8
        %s303 = scalar_lea.vmem [#allocation3], %s302
        %p304 = pneg %p61
        %p305 = pneg %p58
        %s306 = sand.u32 %s26, 1
        %s307 = scalar_lea.sflag [#allocation7], %s306
        %s308 = sand.u32 %s74, 1
        %s309 = scalar_lea.vmem [#allocation6], %s308
        %p310 = pneg %p87
        %p311 = pneg %p84
        %p312 = pneg %p108
        %p313 = pneg %p105
        %p314 = pneg %p129
        %p315 = pneg %p126
        %p316 = pneg %p150
        %p317 = pneg %p147
        %p318 = pneg %p176
        %p319 = pneg %p173
        %s320 = sand.u32 %s163, 1
        %s321 = scalar_lea.sflag [#allocation5], %s320
        %s322 = sand.u32 %s163, 1
        %s323 = scalar_lea.vmem [#allocation11], %s322
        %p324 = scmp.eq.s32.totalorder %s31, 0
        // Predicated region
        $region57: #{tpu_custom_call.1} parent=39 // pred_check
          %p325 = pneg %p324
        $region58: #{tpu_custom_call.1} parent=39 // pred_check_branch
          %327 = sbr.rel (%p325) target = $region60
        $region59: #{tpu_custom_call.1} parent=39 // pred_region
          %vm328 = vcmask 253952
          %329 = vst.msk [vmem:[#allocation2] sm:$0x1] %vm328, 0.0
        $region60: #{tpu_custom_call.1} parent=39 // pred_fallthru
          _
        %v330 = vld [vmem:[%s274] sm:$0xff]
        %v331 = vld [vmem:[#allocation2] sm:$0x1]
        %vm332 = vcmask 64512
        %v334 = vsel %vm332, 1.0, 0
        %336 = vmatpush.msra.mxu0 0.0
        %337 = vmatpush.msra.mxu0 0.0
        %338 = vmatpush.msra.mxu0 0.0
        %339 = vmatpush.msra.mxu0 0.0
        %340 = vmatpush.msra.mxu0 0.0
        %341 = vmatpush.msra.mxu0 0.0
        %342 = vmatpush.msra.mxu0 0.0
        %343 = vmatpush.msra.mxu0 0.0
        %344 = vmatpush.msra.mxu0 0.0
        %345 = vmatpush.msra.mxu0 0.0
        %346 = vmatpush.msra.mxu0 0.0
        %347 = vmatpush.msra.mxu0 0.0
        %348 = vmatpush.msra.mxu0 0.0
        %349 = vmatpush.msra.mxu0 0.0
        %350 = vmatpush.msra.mxu0 0.0
        %351 = vmatpush.msra.mxu0 %v330
        %352 = vmatmul.f32.gmra.mxu0 %v334
        %v353 = vpop.f32.mrf.mxu0
        %v354 = vadd.f32 0.0, %v353
        %355 = vdwg.mxu0
        %v356 = vadd.f32 %v331, %v354
        %vm357 = vcmask 253952
        %358 = vst.msk [vmem:[#allocation2] sm:$0x1] %vm357, %v356
        // Predicated region
        $region61: #{tpu_custom_call.1} parent=39 // pred_check
          %p359 = pneg %p324
        $region62: #{tpu_custom_call.1} parent=39 // pred_check_branch
          %361 = sbr.rel (%p359) target = $region64
        $region63: #{tpu_custom_call.1} parent=39 // pred_region
          %v362 = vld [vmem:[#allocation2] sm:$0x1]
          %v363 = vmul.f32 %v362, 0.125
          %v364 = vld [vmem:[%s283] sm:$0x1]
          %v365 = vld [vmem:[#allocation8] sm:$0xff]
          %v366 = vld [vmem:[#allocation8 + $0x8] sm:$0xff]
          %v367 = vld [vmem:[#allocation9] sm:$0xff]
          %v368 = vld [vmem:[#allocation9 + $0x8] sm:$0xff]
          %v369 = vld [vmem:[#allocation9 + $0x10] sm:$0xff]
          %v370 = vld [vmem:[#allocation9 + $0x18] sm:$0xff]
          %vm371 = vcmask 261120
          %v373 = vsel %vm371, %v363, 0
          %375 = vmatpush.msra.mxu0 0.0
          %376 = vmatpush.msra.mxu0 0.0
          %377 = vmatpush.msra.mxu0 0.0
          %378 = vmatpush.msra.mxu0 0.0
          %379 = vmatpush.msra.mxu0 0.0
          %380 = vmatpush.msra.mxu0 0.0
          %381 = vmatpush.msra.mxu0 0.0
          %382 = vmatpush.msra.mxu0 0.0
          %383 = vmatpush.msra.mxu0 0.0
          %384 = vmatpush.msra.mxu0 0.0
          %385 = vmatpush.msra.mxu0 0.0
          %386 = vmatpush.msra.mxu0 0.0
          %387 = vmatpush.msra.mxu0 %v370
          %388 = vmatpush.msra.mxu0 %v369
          %389 = vmatpush.msra.mxu0 %v368
          %390 = vmatpush.msra.mxu0 %v367
          %391 = vmatmul.f32.gmra.mxu0 %v373
          %v392 = vpop.f32.mrf.mxu0
          %v393 = vadd.f32 0.0, %v392
          %394 = vdwg.mxu0
          %vm395 = vcmask 130048
          %v397 = vsel %vm395, %v364, 0
          %399 = vmatpush.msra.mxu0 0.0
          %400 = vmatpush.msra.mxu0 0.0
          %401 = vmatpush.msra.mxu0 0.0
          %402 = vmatpush.msra.mxu0 0.0
          %403 = vmatpush.msra.mxu0 0.0
          %404 = vmatpush.msra.mxu0 0.0
          %405 = vmatpush.msra.mxu0 0.0
          %406 = vmatpush.msra.mxu0 0.0
          %407 = vmatpush.msra.mxu0 0.0
          %408 = vmatpush.msra.mxu0 0.0
          %409 = vmatpush.msra.mxu0 0.0
          %410 = vmatpush.msra.mxu0 0.0
          %411 = vmatpush.msra.mxu0 0.0
          %412 = vmatpush.msra.mxu0 0.0
          %413 = vmatpush.msra.mxu0 %v366
          %414 = vmatpush.msra.mxu0 %v365
          %415 = vmatmul.f32.gmra.mxu0 %v397
          %v416 = vpop.f32.mrf.mxu0
          %v417 = vadd.f32 %v393, %v416
          %418 = vdwg.mxu0
          %v419 = vld [vmem:[%s4] sm:$0x1]
          %v420 = vadd.f32 %v417, %v419
          %v421 = vxor.u32 %v420, 2147483648
          %v422 = vmul.f32 %v421, 1.442695
          %v423 = vpow.pop %v422
          %v424 = vadd.f32 %v423, 1.0
          %v425 = vrcp.pop %v424
          %v426 = vmul.f32 %v424, %v425
          %v427 = vsub.f32 1.0, %v426
          %v428 = vmul.f32 %v425, %v427
          %v429 = vadd.f32 %v425, %v428
          %vm430 = vweird.f32 %v424
          %vm431 = vweird.f32 %v425
          %vm432 = vmor %vm430, %vm431
          %v433 = vsel %vm432, %v425, %v429
          %v434 = vand.u32 2147483647, %v424
          %vm435 = vcmp.eq.f32.partialorder %v434, 8.507059e+37
          %v436 = vand.u32 %v424, 2147483648
          %v437 = vor.u32 1.1754944e-38, %v436
          %v438 = vsel %vm435, %v437, %v433
          %v439 = vmul.f32 1.0, %v438
          %440 = vst.msk [vmem:[%s323] sm:$0x1] %vm357, %v439
        $region64: #{tpu_custom_call.1} parent=39 // pred_fallthru
          _
        %s441 = sand.u32 %s163, 1
        %s442 = scalar_lea.sflag [#allocation5], %s441
        %s443 = sand.u32 %s163, 1
        %s444 = scalar_lea.vmem [#allocation11], %s443
        // Predicated region
        $region65: #{tpu_custom_call.1} parent=39 // pred_check
          %p445 = pneg %p173
        $region66: #{tpu_custom_call.1} parent=39 // pred_check_branch
          %447 = sbr.rel (%p445) target = $region68
        $region67: #{tpu_custom_call.1} parent=39 // pred_region
          %449 = vsyncadd %s442, 0
          %s450 = scalar_lea.hbm %s5, %s30
          %s452 = sshll.u32 %s444, 4
          %s453 = int_to_ptr.vmem [resolvable:$true] %s452
          %s454 = sshll.u32 %s450, 4
          %s455 = int_to_ptr.hbm [resolvable:$true] %s454
          %457 = dma.vmem_to_hbm [thread:$0]  %s453, 16, %s455, %s442
        $region68: #{tpu_custom_call.1} parent=39 // pred_fallthru
          _
      $region40: #{tpu_custom_call.1} parent=5 // pred_fallthru
        _
      %p458 = scmp.le.s32.totalorder 2, %s21
      // Predicated region
      $region69: #{tpu_custom_call.1} parent=5 // pred_check
        %p459 = pneg %p458
      $region70: #{tpu_custom_call.1} parent=5 // pred_check_branch
        %461 = sbr.rel (%p459) target = $region72
      $region71: #{tpu_custom_call.1} parent=5 // pred_region
        %s462 = ssub.s32 %s21, 2
        // Predicated region
        $region73: #{tpu_custom_call.1} parent=71 // pred_check
          %p463 = pneg %p179
        $region74: #{tpu_custom_call.1} parent=71 // pred_check_branch
          %465 = sbr.rel (%p463) target = $region76
        $region75: #{tpu_custom_call.1} parent=71 // pred_region
          %s466 = sand.u32 %s164, 1
          %s467 = scalar_lea.sflag [#allocation5], %s466
          %s468 = sand.u32 %s164, 1
          %s469 = scalar_lea.vmem [#allocation11], %s468
          %471 = dma.done %s467, 16
        $region76: #{tpu_custom_call.1} parent=71 // pred_fallthru
          _
      $region72: #{tpu_custom_call.1} parent=5 // pred_fallthru
        _
    $region6: #{tpu_custom_call.1} parent=1 // loop_footer
      %s25 = sadd.s32 1, %s21
    $region7: #{tpu_custom_call.1} parent=1 // loop_footer_branch
      %20 = sbr.rel target = $region3
    $region8: #{tpu_custom_call.1} parent=1 // loop_exit
      _
    %472 = vsyncpa [#allocation4], 1
    %s473 = scalar_lea.sflag [#allocation4], 1
    %474 = vsyncpa %s473, 1
    %475 = vsyncpa [#allocation7], 1
    %s476 = scalar_lea.sflag [#allocation7], 1
    %477 = vsyncpa %s476, 1
    %478 = vsyncpa [#allocation10], 1
    %479 = vsyncpa [#allocation5], 1
    %s480 = scalar_lea.sflag [#allocation5], 1
    %481 = vsyncpa %s480, 1

</llo_original>
